<compile_context>
chip_gen: v5e
topology: v5e:2x2
jax: 0.10.0
libtpu: 0.0.40
codegen_flags: <defaults>
</compile_context>

<pallas_src>
import functools
import math

import jax
import jax.numpy as jnp
from jax.experimental import pallas as pl
from jax.experimental.pallas import tpu as pltpu

_SUBLANE = 8     # f32 sublane tile
_LANE = 128      # lane tile


# ----------------------------- Pallas kernels -------------------------------

def _pos_enc_kernel_2d(x_ref, pe_ref, o_ref, *, batch):
    """Lane-dense small-batch path.

    x_ref : (ts, B*D) tile of the (S, B*D) view of the input
    pe_ref: (ts, D)   positional-encoding rows for this tile
    """
    pe = pe_ref[...].astype(jnp.float32)
    # The (S, B, D) -> (S, B*D) view places the B batch slots side-by-side on
    # the lane axis, so replicate the pe row B times along lanes (cheap XLU
    # work that hides under the DMAs of this memory-bound kernel).
    if batch > 1:
        pe = jnp.tile(pe, (1, batch))
    o_ref[...] = (x_ref[...].astype(jnp.float32) + pe).astype(o_ref.dtype)


def _pos_enc_kernel_3d(x_ref, pe_ref, o_ref):
    """Sublane-dense path (B >= 8, or B*D not lane-aligned).

    x_ref : (ts, B, D) tile, pe_ref: (ts, 1, D) tile -> broadcast over batch.
    pe keeps its singleton dim here: the 1 -> 8 sublane padding only costs a
    little VMEM (not HBM bytes), and with B >= 8 it is <= one x buffer.
    """
    o_ref[...] = (x_ref[...].astype(jnp.float32)
                  + pe_ref[...].astype(jnp.float32)).astype(o_ref.dtype)


# ------------------------------ tile sizing ----------------------------------

def _round_up(n, m):
    return ((n + m - 1) // m) * m


def _pick_seq_tile(S, padded_row_bytes, target_bytes):
    """Largest sequence tile whose *padded* x-block is ~target_bytes.

    Returns either S (full-extent tile) or a multiple of 8 that is < S, so the
    block's sublane dim always satisfies the (8, 128) block-shape rule.
    """
    ts = max(1, target_bytes // max(padded_row_bytes, 1))
    if ts >= S:
        if S <= 4 * _SUBLANE:
            return S                      # tiny problem: one step is cheapest
        ts = pl.cdiv(S, 2)                # >= 2 grid steps: v7x megacore sharding
    ts = _round_up(min(ts, S), _SUBLANE)
    return S if ts >= S else ts


# ------------------------------- wrapper --------------------------------------

def positional_encoding(x, pe, *, seq_tile=None, target_block_bytes=4 << 20):
    """Pallas equivalent of PositionalEncoding.forward (eval mode).

    x : (S, B, D); pe : (max_len, 1, D) (the module's register_buffer).
    Returns x + pe[:S].  Dropout is identity at inference.

    target_block_bytes: per-step x-tile size in *padded* bytes.  ~4 MiB fits
    everywhere with the explicit 32 MiB VMEM limit below; sweep to 6-8 MiB on
    v6e/v7x for the last few % of HBM roofline.
    """
    S, B, D = x.shape
    max_len = pe.shape[0]
    assert pe.shape == (max_len, 1, D)
    assert S <= max_len, "sequence longer than positional-encoding buffer"

    x_itemsize = jnp.dtype(x.dtype).itemsize
    pe_itemsize = jnp.dtype(pe.dtype).itemsize

    # Small batch (B < 8) wastes sublanes and forces masked vst; present x/out
    # as a lane-dense 2-D (S, B*D) view instead when B*D is lane-aligned.
    use_2d = (B < _SUBLANE) and (B * D) % _LANE == 0

    if use_2d:
        padded_row_bytes = B * D * x_itemsize                    # lane-dense
        x_in = x.reshape(S, B * D)
        pe_in = pe.reshape(max_len, D)        # squeeze singleton batch dim
    else:
        padded_row_bytes = (_round_up(B, _SUBLANE) * _round_up(D, _LANE)
                            * x_itemsize)     # (8,128)-padded VMEM rows
        x_in = x
        pe_in = pe

    if seq_tile is None:
        seq_tile = _pick_seq_tile(S, padded_row_bytes, target_block_bytes)
    grid = (pl.cdiv(S, seq_tile),)            # ragged last block is write-masked

    if use_2d and seq_tile % _SUBLANE != 0:
        # Only possible when seq_tile == S (tiny sequence): trim pe so the pe
        # block's sublane dim equals its full extent (the (8,128) rule's
        # "equal full dim" escape hatch). The copy is a few rows.
        pe_in = pe_in[:S]

    # Padded, double-buffered VMEM footprint: x + out + pe, 2 buffers each.
    if use_2d:
        x_block_bytes = _round_up(seq_tile, _SUBLANE) * padded_row_bytes
        pe_block_bytes = (_round_up(seq_tile, _SUBLANE)
                          * _round_up(D, _LANE) * pe_itemsize)
    else:
        x_block_bytes = seq_tile * padded_row_bytes
        pe_block_bytes = seq_tile * _SUBLANE * _round_up(D, _LANE) * pe_itemsize
    vmem_bytes = 2 * (2 * x_block_bytes + pe_block_bytes)
    # 32 MiB is safe on v5e/v6e/v7x; grow (capped) only if oversized tiles
    # were requested explicitly.
    vmem_limit = int(min(max(32 << 20, vmem_bytes * 5 // 4), 48 << 20))

    cost = pl.CostEstimate(
        flops=S * B * D,
        transcendentals=0,
        bytes_accessed=2 * S * B * D * x_itemsize + S * D * pe_itemsize,
    )

    if use_2d:
        kernel = functools.partial(_pos_enc_kernel_2d, batch=B)
        x_spec = pl.BlockSpec((seq_tile, B * D), lambda i: (i, 0))
        pe_spec = pl.BlockSpec((seq_tile, D), lambda i: (i, 0))
        out_spec = pl.BlockSpec((seq_tile, B * D), lambda i: (i, 0))
        out_shape = jax.ShapeDtypeStruct((S, B * D), x.dtype)
    else:
        kernel = _pos_enc_kernel_3d
        x_spec = pl.BlockSpec((seq_tile, B, D), lambda i: (i, 0, 0))
        pe_spec = pl.BlockSpec((seq_tile, 1, D), lambda i: (i, 0, 0))
        out_spec = pl.BlockSpec((seq_tile, B, D), lambda i: (i, 0, 0))
        out_shape = jax.ShapeDtypeStruct((S, B, D), x.dtype)

    out = pl.pallas_call(
        kernel,
        grid=grid,
        out_shape=out_shape,
        in_specs=[x_spec, pe_spec],
        out_specs=out_spec,
        compiler_params=pltpu.CompilerParams(
            dimension_semantics=("parallel",),
            vmem_limit_bytes=vmem_limit,
        ),
        cost_estimate=cost,
    )(x_in, pe_in)

    return out.reshape(S, B, D) if use_2d else out


# ------------------------------- JAX glue -----------------------------------

def make_pe(max_len, d_model):
    """Same buffer as the PyTorch module's register_buffer: (max_len, 1, d_model)."""
    position = jnp.arange(max_len, dtype=jnp.float32)[:, None]
    div_term = jnp.exp(jnp.arange(0, d_model, 2, dtype=jnp.float32)
                       * (-math.log(10000.0) / d_model))
    angles = position * div_term                       # (max_len, ceil(d/2))
    pe = jnp.zeros((max_len, 1, d_model), dtype=jnp.float32)
    pe = pe.at[:, 0, 0::2].set(jnp.sin(angles))
    pe = pe.at[:, 0, 1::2].set(jnp.cos(angles[:, : d_model // 2]))  # odd-d safe
    return pe


# TODO(synk): training-mode stochastic dropout (p=0.1, 1/(1-p) scaling) is not
# implemented; this kernel matches the module in eval/inference mode where
# Dropout is the identity.


if __name__ == "__main__":
    key = jax.random.PRNGKey(0)
    k1, k2 = jax.random.split(key)

    d_model, max_len = 128, 16
    pe = make_pe(max_len, d_model)

    # Case 1: small batch -> lane-dense 2-D path (B < 8, B*D multiple of 128).
    S, B = 8, 2
    x = jax.random.normal(k1, (S, B, d_model), jnp.float32)
    out = positional_encoding(x, pe)
    jax.block_until_ready(out)
    ref = x + pe[:S]
    assert out.shape == (S, B, d_model)
    assert jnp.allclose(out, ref, atol=1e-6, rtol=1e-6)

    # Case 2: batch >= 8 -> sublane-dense 3-D broadcast path.
    S2, B2 = 12, 8
    x2 = jax.random.normal(k2, (S2, B2, d_model), jnp.float32)
    out2 = positional_encoding(x2, pe)
    jax.block_until_ready(out2)
    ref2 = x2 + pe[:S2]
    assert out2.shape == (S2, B2, d_model)
    assert jnp.allclose(out2, ref2, atol=1e-6, rtol=1e-6)

    print("KERNEL_OK")
</pallas_src>

<mosaic_0001>
module attributes {stable_mosaic.version = 11 : i64} {
  func.func @_pos_enc_kernel_2d(%arg0: i32, %arg1: memref<8x256xf32, #tpu.memory_space<vmem>>, %arg2: memref<8x128xf32, #tpu.memory_space<vmem>>, %arg3: memref<8x256xf32, #tpu.memory_space<vmem>>) attributes {dimension_semantics = [#tpu.dimension_semantics<parallel>], iteration_bounds = array<i64: 1>, scalar_prefetch = 0 : i64, scratch_operands = 0 : i64, tpu.core_type = #tpu.core_type<tc>, window_params = [{transform_indices = @transform_0, window_bounds = array<i64: 8, 256>}, {transform_indices = @transform_1, window_bounds = array<i64: 8, 128>}, {transform_indices = @transform_2, window_bounds = array<i64: 8, 256>}]} {
    %c0 = arith.constant 0 : index
    %c0_0 = arith.constant 0 : index
    %0 = vector.load %arg2[%c0, %c0_0] : memref<8x128xf32, #tpu.memory_space<vmem>>, vector<8x128xf32>
    %1 = tpu.concatenate %0, %0 in 1 : vector<8x128xf32>, vector<8x128xf32> -> vector<8x256xf32>
    %c0_1 = arith.constant 0 : index
    %c0_2 = arith.constant 0 : index
    %2 = vector.load %arg1[%c0_1, %c0_2] : memref<8x256xf32, #tpu.memory_space<vmem>>, vector<8x256xf32>
    %3 = arith.addf %2, %1 : vector<8x256xf32>
    %c0_3 = arith.constant 0 : index
    %c0_4 = arith.constant 0 : index
    %4 = vector.load %arg3[%c0_3, %c0_4] : memref<8x256xf32, #tpu.memory_space<vmem>>, vector<8x256xf32>
    tpu.vector_store %arg3[%c0_3, %c0_4], %3 {strides = array<i32>} : memref<8x256xf32, #tpu.memory_space<vmem>>, vector<8x256xf32>,
    return
  }
  func.func @transform_0(%arg0: i32) -> (i32, i32) {
    %c0_i32 = arith.constant 0 : i32
    %c0_i32_0 = arith.constant 0 : i32
    return %arg0, %c0_i32 : i32, i32
  }
  func.func @transform_1(%arg0: i32) -> (i32, i32) {
    %c0_i32 = arith.constant 0 : i32
    %c0_i32_0 = arith.constant 0 : i32
    return %arg0, %c0_i32 : i32, i32
  }
  func.func @transform_2(%arg0: i32) -> (i32, i32) {
    %c0_i32 = arith.constant 0 : i32
    %c0_i32_0 = arith.constant 0 : i32
    return %arg0, %c0_i32 : i32, i32
  }
}

</mosaic_0001>

<llo_original>
// kernel: tpu_custom_call.1
$region0: #{tpu_custom_call.1}
  #allocation0 [shape = 'u32[]', space=smem, size = 0x4, offset = 0x4, fixed_abs, tag = 'smem constant byte address 0x4 - core index']
  #allocation1 [shape = 'u32[72,128]{1,0:T(1,128)}', space=vmem, size = 0x9000, scoped, tag = 'internal scratch']
  %s0 = inlined_call_operand.hbm [shape: f32[8,256], index: 0, kind: input, shape index: {}]
  %s1 = inlined_call_operand.hbm [shape: f32[16,128], index: 1, kind: input, shape index: {}]
  %s2 = inlined_call_operand.hbm [shape: f32[8,256], index: 2, kind: output, shape index: {}]
  %s3 = sld [smem:[#allocation0]]
  $region26: #{tpu_custom_call.1} parent=0
    _
  %s5 = ssub.s32 1, %s3
  %s6 = scalar_select 0, %s5, %s3
  $region1: #{tpu_custom_call.1} parent=0
    #allocation2 [shape = 'u8[8192]{0}', space=vmem, size = 0x2000, scoped, tag = 'input window, operand 0, single buffered']
    #allocation3 [shape = 's32[1]{0}', space=sflag, size = 0x4, scoped, tag = 'scoped memory for tpu_custom_call.1']
    #allocation4 [shape = 's32[1]{0}', space=sflag, size = 0x4, scoped, tag = 'scoped memory for tpu_custom_call.1']
    #allocation5 [shape = 'u8[4096]{0}', space=vmem, size = 0x1000, scoped, tag = 'input window, operand 1, single buffered']
    #allocation6 [shape = 's32[1]{0}', space=sflag, size = 0x4, scoped, tag = 'scoped memory for tpu_custom_call.1']
    #allocation7 [shape = 'u8[8192]{0}', space=vmem, size = 0x2000, scoped, tag = 'output window, operand 0, single buffered']
    %7 = vsyncpa [#allocation3], 0
    %8 = vsyncpa [#allocation6], 0
    %9 = vsyncpa [#allocation4], 0
    // Predicated region
    $region2: #{tpu_custom_call.1} parent=1 // pred_check
      _
    $region3: #{tpu_custom_call.1} parent=1 // pred_check_branch
      %11 = sbr.rel (0) target = $region5
    $region4: #{tpu_custom_call.1} parent=1 // pred_region
      %13 = vsyncadd [#allocation3], 0
      %s15 = sshll.u32 %s0, 4
      %s16 = int_to_ptr.hbm [resolvable:$true] %s15
      %s17 = sshll.u32 [#allocation2], 4
      %s18 = int_to_ptr.vmem [resolvable:$true] %s17
      %20 = dma.hbm_to_vmem [thread:$0]  %s16, 256, %s18, [#allocation3]
    $region5: #{tpu_custom_call.1} parent=1 // pred_fallthru
      _
    // Predicated region
    $region6: #{tpu_custom_call.1} parent=1 // pred_check
      _
    $region7: #{tpu_custom_call.1} parent=1 // pred_check_branch
      %22 = sbr.rel (0) target = $region9
    $region8: #{tpu_custom_call.1} parent=1 // pred_region
      %24 = vsyncadd [#allocation6], 0
      %s26 = sshll.u32 %s1, 4
      %s27 = int_to_ptr.hbm [resolvable:$true] %s26
      %s28 = sshll.u32 [#allocation5], 4
      %s29 = int_to_ptr.vmem [resolvable:$true] %s28
      %31 = dma.hbm_to_vmem [thread:$0]  %s27, 128, %s29, [#allocation6]
    $region9: #{tpu_custom_call.1} parent=1 // pred_fallthru
      _
    // Predicated region
    $region10: #{tpu_custom_call.1} parent=1 // pred_check
      _
    $region11: #{tpu_custom_call.1} parent=1 // pred_check_branch
      %33 = sbr.rel (0) target = $region13
    $region12: #{tpu_custom_call.1} parent=1 // pred_region
      %35 = dma.done [#allocation3], 256
    $region13: #{tpu_custom_call.1} parent=1 // pred_fallthru
      _
    // Predicated region
    $region14: #{tpu_custom_call.1} parent=1 // pred_check
      _
    $region15: #{tpu_custom_call.1} parent=1 // pred_check_branch
      %37 = sbr.rel (0) target = $region17
    $region16: #{tpu_custom_call.1} parent=1 // pred_region
      %39 = dma.done [#allocation6], 128
    $region17: #{tpu_custom_call.1} parent=1 // pred_fallthru
      _
    %v40 = vld [vmem:[#allocation5] sm:$0xff]
    %v41 = vld [vmem:[#allocation2] sm:$0xff]
    %v42 = vld [vmem:[#allocation2 + $0x8] sm:$0xff]
    %v43 = vadd.f32 %v41, %v40
    %v44 = vadd.f32 %v42, %v40
    %45 = vst [vmem:[#allocation7] sm:$0xff] %v43
    %46 = vst [vmem:[#allocation7 + $0x8] sm:$0xff] %v44
    // Predicated region
    $region18: #{tpu_custom_call.1} parent=1 // pred_check
      _
    $region19: #{tpu_custom_call.1} parent=1 // pred_check_branch
      %48 = sbr.rel (0) target = $region21
    $region20: #{tpu_custom_call.1} parent=1 // pred_region
      %50 = vsyncadd [#allocation4], 0
      %s52 = sshll.u32 [#allocation7], 4
      %s53 = int_to_ptr.vmem [resolvable:$true] %s52
      %s54 = sshll.u32 %s2, 4
      %s55 = int_to_ptr.hbm [resolvable:$true] %s54
      %57 = dma.vmem_to_hbm [thread:$0]  %s53, 256, %s55, [#allocation4]
    $region21: #{tpu_custom_call.1} parent=1 // pred_fallthru
      _
    // Predicated region
    $region22: #{tpu_custom_call.1} parent=1 // pred_check
      _
    $region23: #{tpu_custom_call.1} parent=1 // pred_check_branch
      %59 = sbr.rel (0) target = $region25
    $region24: #{tpu_custom_call.1} parent=1 // pred_region
      %61 = dma.done [#allocation4], 256
    $region25: #{tpu_custom_call.1} parent=1 // pred_fallthru
      _
    %62 = vsyncpa [#allocation3], 1
    %63 = vsyncpa [#allocation6], 1
    %64 = vsyncpa [#allocation4], 1

</llo_original>
